<compile_context>
chip_gen: v7x
topology: tpu7x:2x2x1
jax: 0.10.0
libtpu: 0.0.40
codegen_flags: <defaults>
</compile_context>

<pallas_src>
import functools
import math

import jax
import jax.numpy as jnp
import numpy as np
from jax import lax
from jax.experimental import pallas as pl
from jax.experimental.pallas import tpu as pltpu

_SUBLANE_MULT = 16             # sublane multiple legal for both f32 and bf16 blocks
_DEFAULT_TILE_ELEMS = 1 << 20  # ~1M elems per streamed tile (~4 MiB f32 working set)


def _partial_sumsq_kernel(z_ref, out_ref, *, batch, tile_rows):
    """Per-tile partial sum(z**2) with ragged batch-tail masking.

    z_ref:   (tile_rows, D) tile of z0 (input dtype, cast to f32 in-kernel)
    out_ref: (1, 1) f32 SMEM block, unique per grid step (parallel-safe)
    """
    i = pl.program_id(0)
    valid = batch - i * tile_rows                       # real rows in this tile
    z = z_ref[...].astype(jnp.float32)                  # (TB, D)
    row_ids = lax.broadcasted_iota(jnp.int32, (z.shape[0], 1), 0)
    # OOB tail rows of the last tile hold garbage -> select, don't multiply.
    zsq = jnp.where(row_ids < valid, z * z, 0.0)
    out_ref[0, 0] = jnp.sum(zsq)


def training_loss(z0, inverse_log_det, *, max_tile_elems=_DEFAULT_TILE_ELEMS):
    """z0: (B, D), inverse_log_det: (B,). Returns scalar f32 loss."""
    B, D = z0.shape

    # Row-tile size: as many batch rows as fit the per-tile element budget,
    # rounded to a sublane-safe multiple.  No padding / no copies: the ragged
    # last tile is masked inside the kernel instead.
    rows_budget = max(1, max_tile_elems // max(D, 1))
    if rows_budget >= B:
        tb = B                                           # single full-extent tile
    else:
        tb = max(_SUBLANE_MULT, (rows_budget // _SUBLANE_MULT) * _SUBLANE_MULT)
        tb = min(tb, B)
    grid = pl.cdiv(B, tb)
    # TODO(synk): for extremely large D (> ~4M elems/row) a single 16-row tile can
    # exceed VMEM; would need to also tile the feature axis in that regime.

    kernel = functools.partial(_partial_sumsq_kernel, batch=B, tile_rows=tb)

    partials = pl.pallas_call(
        kernel,
        out_shape=jax.ShapeDtypeStruct((grid, 1), jnp.float32),
        grid_spec=pltpu.PrefetchScalarGridSpec(
            num_scalar_prefetch=0,
            grid=(grid,),
            in_specs=[pl.BlockSpec((tb, D), lambda i: (i, 0))],   # streamed z0 tiles
            out_specs=pl.BlockSpec((1, 1), lambda i: (i, 0),
                                   memory_space=pltpu.SMEM),      # per-tile partial
        ),
        compiler_params=pltpu.CompilerParams(
            dimension_semantics=("parallel",),      # independent tiles -> both TCs on v7x
            vmem_limit_bytes=48 * 1024 * 1024,      # multi-MiB tiles; < v7x 64 MiB VMEM
        ),
        cost_estimate=pl.CostEstimate(
            flops=2 * B * D,
            transcendentals=0,
            bytes_accessed=B * D * z0.dtype.itemsize + grid * 4,
        ),
    )(z0)

    # Tiny O(grid) + O(B) combines in the wrapper (per perf review: keeps the big
    # inverse_log_det block out of kernel VMEM and works with the parallel grid).
    sum_sq = jnp.sum(partials)
    sum_ild = jnp.sum(inverse_log_det.astype(jnp.float32))
    log_norm = jnp.float32(0.5 * D * math.log(2.0 * math.pi))
    inv_b = jnp.float32(1.0 / B)
    # -(mean(log_prob_z0) + mean(inverse_log_det))
    return 0.5 * sum_sq * inv_b + log_norm - sum_ild * inv_b


def training_loss_ref(z0, inverse_log_det):
    dim = z0.shape[-1]
    log_prob = (-0.5 * jnp.sum(z0.astype(jnp.float32) ** 2, axis=-1)
                - 0.5 * dim * jnp.log(2.0 * jnp.pi))
    return -(log_prob + inverse_log_det.astype(jnp.float32)).mean()


if __name__ == "__main__":
    key = jax.random.PRNGKey(0)
    k1, k2, k3, k4 = jax.random.split(key, 4)

    # Case 1: module-typical small shape (batch=8, latent dim=32), single tile.
    B, D = 8, 32
    z0 = jax.random.normal(k1, (B, D), dtype=jnp.float32)
    ild = jax.random.normal(k2, (B,), dtype=jnp.float32)
    loss = training_loss(z0, ild)
    jax.block_until_ready(loss)
    np.testing.assert_allclose(np.asarray(loss),
                               np.asarray(training_loss_ref(z0, ild)),
                               rtol=1e-5, atol=1e-5)

    # Case 2: multi-tile grid with a ragged last tile (exercises in-kernel masking).
    B2, D2 = 50, 96
    z0b = jax.random.normal(k3, (B2, D2), dtype=jnp.float32)
    ildb = jax.random.normal(k4, (B2,), dtype=jnp.float32)
    loss2 = training_loss(z0b, ildb, max_tile_elems=16 * D2)  # forces tb=16, grid=4
    jax.block_until_ready(loss2)
    np.testing.assert_allclose(np.asarray(loss2),
                               np.asarray(training_loss_ref(z0b, ildb)),
                               rtol=1e-5, atol=1e-5)

    print("KERNEL_OK")
</pallas_src>

<mosaic_0001>
module attributes {stable_mosaic.version = 11 : i64} {
  func.func @_partial_sumsq_kernel(%arg0: i32, %arg1: memref<8x32xf32, #tpu.memory_space<vmem>>, %arg2: memref<1x1xf32, #tpu.memory_space<smem>>) attributes {dimension_semantics = [#tpu.dimension_semantics<parallel>], iteration_bounds = array<i64: 1>, scalar_prefetch = 0 : i64, scratch_operands = 0 : i64, tpu.core_type = #tpu.core_type<tc>, window_params = [{transform_indices = @transform_0, window_bounds = array<i64: 8, 32>}, {transform_indices = @transform_1, window_bounds = array<i64: 1, 1>}]} {
    %c8_i32 = arith.constant 8 : i32
    %0 = arith.muli %arg0, %c8_i32 : i32
    %c8_i32_0 = arith.constant 8 : i32
    %1 = arith.subi %c8_i32_0, %0 : i32
    %c0 = arith.constant 0 : index
    %c0_1 = arith.constant 0 : index
    %2 = vector.load %arg1[%c0, %c0_1] : memref<8x32xf32, #tpu.memory_space<vmem>>, vector<8x32xf32>
    %3 = tpu.iota {dimensions = array<i32: 0>} : vector<8x1xi32>
    %4 = vector.broadcast %1 : i32 to vector<8x1xi32>
    %5 = arith.cmpi slt, %3, %4 : vector<8x1xi32>
    %6 = arith.mulf %2, %2 : vector<8x32xf32>
    %cst = arith.constant 0.000000e+00 : f32
    %7 = vector.shape_cast %5 : vector<8x1xi1> to vector<8x1xi1>
    %8 = vector.broadcast %7 : vector<8x1xi1> to vector<8x32xi1>
    %9 = vector.broadcast %cst : f32 to vector<8x32xf32>
    %10 = arith.select %8, %6, %9 : vector<8x32xi1>, vector<8x32xf32>
    %11 = vector.shape_cast %10 : vector<8x32xf32> to vector<1x8x32xf32>
    %cst_2 = arith.constant dense<0.000000e+00> : vector<1xf32>
    %12 = vector.multi_reduction <add>, %11, %cst_2 [1, 2] : vector<1x8x32xf32> to vector<1xf32>
    %13 = vector.shape_cast %12 : vector<1xf32> to vector<1x1x1xf32>
    %14 = vector.extract %13[0, 0, 0] : f32 from vector<1x1x1xf32>
    %c0_3 = arith.constant 0 : index
    %c0_4 = arith.constant 0 : index
    %15 = memref.load %arg2[%c0_3, %c0_4] : memref<1x1xf32, #tpu.memory_space<smem>>
    memref.store %14, %arg2[%c0_3, %c0_4] : memref<1x1xf32, #tpu.memory_space<smem>>
    return
  }
  func.func @transform_0(%arg0: i32) -> (i32, i32) {
    %c0_i32 = arith.constant 0 : i32
    %c0_i32_0 = arith.constant 0 : i32
    return %arg0, %c0_i32 : i32, i32
  }
  func.func @transform_1(%arg0: i32) -> (i32, i32) {
    %c0_i32 = arith.constant 0 : i32
    %c0_i32_0 = arith.constant 0 : i32
    return %arg0, %c0_i32 : i32, i32
  }
}

</mosaic_0001>

<llo_original>
// kernel: tpu_custom_call.1
$region0: #{tpu_custom_call.1}
  #allocation0 [shape = 'u32[]', space=smem, size = 0x4, offset = 0x4, fixed_abs, tag = 'smem constant byte address 0x4 - core index']
  #allocation1 [shape = 'u32[144,128]{1,0:T(1,128)}', space=vmem, size = 0x12000, scoped, tag = 'internal scratch']
  %s0 = inlined_call_operand.hbm [shape: f32[8,32], index: 0, kind: input, shape index: {}]
  %s1 = inlined_call_operand.hbm [shape: f32[1,1], index: 1, kind: output, shape index: {}]
  %s2 = sld [smem:[#allocation0]]
  $region18: #{tpu_custom_call.1} parent=0
    _
  %s4 = ssub.s32 1, %s2
  %s5 = scalar_select 0, %s4, %s2
  $region1: #{tpu_custom_call.1} parent=0
    #allocation2 [shape = 'u8[4096]{0}', space=vmem, size = 0x1000, scoped, tag = 'input window, operand 0, single buffered']
    #allocation3 [shape = 's32[1]{0}', space=sflag, size = 0x4, scoped, tag = 'scoped memory for tpu_custom_call.1']
    #allocation4 [shape = 's32[1]{0}', space=sflag, size = 0x4, scoped, tag = 'scoped memory for tpu_custom_call.1']
    #allocation5 [shape = 'u8[512]{0}', space=smem, size = 0x200, scoped, tag = 'output window, operand 0, single buffered']
    %6 = vsyncpa [#allocation3], 0
    %7 = vsyncpa [#allocation4], 0
    // Predicated region
    $region2: #{tpu_custom_call.1} parent=1 // pred_check
      _
    $region3: #{tpu_custom_call.1} parent=1 // pred_check_branch
      %9 = sbr.rel (0) target = $region5
    $region4: #{tpu_custom_call.1} parent=1 // pred_region
      %s11 = ssub.s32 128, 128
      %12 = vsyncadd [#allocation3], %s11
      %s14 = sshll.u32 [#allocation2], 4
      %s15 = int_to_ptr.vmem [resolvable:$true] %s14
      %17 = dma.hbm_to_vmem [thread:$0]  %s0, 128, %s15, [#allocation3]
    $region5: #{tpu_custom_call.1} parent=1 // pred_fallthru
      _
    // Predicated region
    $region6: #{tpu_custom_call.1} parent=1 // pred_check
      _
    $region7: #{tpu_custom_call.1} parent=1 // pred_check_branch
      %19 = sbr.rel (0) target = $region9
    $region8: #{tpu_custom_call.1} parent=1 // pred_region
      %20 = dma.done [#allocation3], 128
    $region9: #{tpu_custom_call.1} parent=1 // pred_fallthru
      _
    %s21 = smul.u32 0, 8
    %s22 = ssub.s32 8, %s21
    %v23 = vld [vmem:[#allocation2] sm:$0xff]
    %v24 = vlaneseq
    %v25 = vshrl.u32 %v24, 7
    %v26 = vstv %s22
    %vm27 = vcmp.lt.s32.totalorder %v25, %v26
    %v28 = vmul.f32 %v23, %v23
    %v29 = vsel %vm27, 1, 0
    %vm30 = vcmp.eq.s32.totalorder %v29, 1
    %v31 = vsel %vm30, %v28, 0.0
    %vm32 = vcmask 261120
    %v33 = vsel %vm32, %v31, 0.0
    %34 = vadd.xlane.f32.xlu0 %v33
    %v35 = vpop.xlane.xlu0 %34
    %v36 = vrot.slane %v35, 4
    %v37 = vadd.f32 %v35, %v36
    %v38 = vrot.slane %v37, 2
    %v39 = vadd.f32 %v37, %v38
    %v40 = vrot.slane %v39, 1
    %v41 = vadd.f32 %v39, %v40
    %s42 = vtos %v41
    %s43 = scalar_lea.smem [#allocation5], 0
    %44 = sst [smem:[%s43]] %s42
    // Predicated region
    $region10: #{tpu_custom_call.1} parent=1 // pred_check
      _
    $region11: #{tpu_custom_call.1} parent=1 // pred_check_branch
      %46 = sbr.rel (0) target = $region13
    $region12: #{tpu_custom_call.1} parent=1 // pred_region
      %s48 = ssub.s32 16, 16
      %49 = vsyncadd [#allocation4], %s48
      %52 = dma.smem_to_hbm [#allocation5], 16, %s1, [#allocation4]
    $region13: #{tpu_custom_call.1} parent=1 // pred_fallthru
      _
    // Predicated region
    $region14: #{tpu_custom_call.1} parent=1 // pred_check
      _
    $region15: #{tpu_custom_call.1} parent=1 // pred_check_branch
      %54 = sbr.rel (0) target = $region17
    $region16: #{tpu_custom_call.1} parent=1 // pred_region
      %55 = dma.done [#allocation4], 16
    $region17: #{tpu_custom_call.1} parent=1 // pred_fallthru
      _
    %56 = sfence
    %57 = vsyncpa [#allocation3], 1
    %58 = vsyncpa [#allocation4], 1

</llo_original>
